<compile_context>
chip_gen: v5e
topology: v5e:2x2
jax: 0.10.0
libtpu: 0.0.40
codegen_flags: <defaults>
</compile_context>

<pallas_src>
import jax
import jax.numpy as jnp
from jax.experimental import pallas as pl
from jax.experimental.pallas import tpu as pltpu

# ---- static problem config (matches the module semantics) ----
N, CIN, H, W = 2, 3, 16, 16
COUT, KH, KW = 1, 3, 3
HO, WO = H - KH + 1, W - KW + 1   # valid conv, stride 1 -> 14 x 14


def conv2d_kernel(w_ref, b_ref, x_ref, o_ref):
    # w_ref: SMEM (CIN*KH*KW,) f32 -- flat weight table (COUT == 1, asserted in wrapper)
    # b_ref: SMEM (COUT,)      f32 -- bias
    # x_ref: VMEM (N, CIN, H, W)   f32 -- raw NCHW input
    # o_ref: VMEM (N, COUT, HO, WO) f32 -- raw NCHW output (written directly)

    # Issue all scalar weight reads up front so the sld + splat work overlaps
    # with the VALU multiply-adds.
    w = [w_ref[i] for i in range(CIN * KH * KW)]
    bias = b_ref[0]

    for n in range(N):
        # 9 independent full-tile accumulators (one per (kh, kw) tap).
        # Chain length per accumulator = CIN = 3 dependent FMAs.
        acc = [[(jnp.full((H, W), bias, jnp.float32) if (kh, kw) == (0, 0)
                 else jnp.zeros((H, W), jnp.float32))
                for kw in range(KW)] for kh in range(KH)]

        for c in range(CIN):
            xc = x_ref[n, c]            # (H, W) f32, full aligned tile
            for kh in range(KH):
                for kw in range(KW):
                    acc[kh][kw] = acc[kh][kw] + w[c * KH * KW + kh * KW + kw] * xc

        # Apply the (kh, kw) tap offsets once, outside the FMA chains, via
        # static slices of the finished accumulators; balanced tree-sum.
        parts = [acc[kh][kw][kh:kh + HO, kw:kw + WO]
                 for kh in range(KH) for kw in range(KW)]
        while len(parts) > 1:
            nxt = [parts[i] + parts[i + 1] for i in range(0, len(parts) - 1, 2)]
            if len(parts) % 2:
                nxt.append(parts[-1])
            parts = nxt

        o_ref[n, 0, :, :] = parts[0]


def conv2d_pallas(x, weight, bias):
    """x: (N, CIN, H, W) f32; weight: (COUT, CIN, KH, KW); bias: (COUT,)."""
    assert x.shape == (N, CIN, H, W), x.shape
    # Flat w_ref[i] indexing assumes a single output channel.
    assert weight.shape == (COUT, CIN, KH, KW) and COUT == 1, weight.shape
    assert bias.shape == (COUT,), bias.shape

    w_flat = weight.reshape(-1).astype(jnp.float32)   # (CIN*KH*KW,)
    b = bias.astype(jnp.float32)

    return pl.pallas_call(
        conv2d_kernel,
        out_shape=jax.ShapeDtypeStruct((N, COUT, HO, WO), jnp.float32),
        in_specs=[
            pl.BlockSpec(memory_space=pltpu.MemorySpace.SMEM),   # weights (scalars)
            pl.BlockSpec(memory_space=pltpu.MemorySpace.SMEM),   # bias (scalar)
            pl.BlockSpec(memory_space=pltpu.MemorySpace.VMEM),   # raw NCHW input
        ],
        out_specs=pl.BlockSpec(memory_space=pltpu.MemorySpace.VMEM),
        # ~12 KB VMEM total; no vmem_limit_bytes / tiling needed on v5e/v6e/v7x.
    )(w_flat, b, x.astype(jnp.float32))


if __name__ == "__main__":
    key = jax.random.PRNGKey(0)
    kx, kw_, kb = jax.random.split(key, 3)

    # Deterministic synthetic inputs/params (Conv2d(3 -> 1, kernel 3x3) shapes).
    x = jax.random.normal(kx, (N, CIN, H, W), dtype=jnp.float32)
    fan_in = CIN * KH * KW
    bound = 1.0 / jnp.sqrt(fan_in)
    weight = jax.random.uniform(kw_, (COUT, CIN, KH, KW), jnp.float32, -bound, bound)
    bias = jax.random.uniform(kb, (COUT,), jnp.float32, -bound, bound)

    out = jax.jit(conv2d_pallas)(x, weight, bias)
    out = jax.block_until_ready(out)

    # Reference check with XLA conv (NCHW, valid padding).
    ref = jax.lax.conv_general_dilated(
        x, weight, window_strides=(1, 1), padding="VALID",
        dimension_numbers=("NCHW", "OIHW", "NCHW"),
    ) + bias.reshape(1, COUT, 1, 1)
    assert out.shape == (N, COUT, HO, WO), out.shape
    assert jnp.allclose(out, ref, atol=1e-5, rtol=1e-5), "mismatch vs XLA reference"

    print("KERNEL_OK")
</pallas_src>

<mosaic_0001>
module attributes {stable_mosaic.version = 11 : i64} {
  func.func @conv2d_kernel(%arg0: memref<27xf32, #tpu.memory_space<smem>>, %arg1: memref<1xf32, #tpu.memory_space<smem>>, %arg2: memref<2x3x16x16xf32, #tpu.memory_space<vmem>>, %arg3: memref<2x1x14x14xf32, #tpu.memory_space<vmem>>) attributes {dimension_semantics = [], scalar_prefetch = 0 : i64, scratch_operands = 0 : i64, tpu.core_type = #tpu.core_type<tc>} {
    %c0 = arith.constant 0 : index
    %0 = memref.load %arg0[%c0] : memref<27xf32, #tpu.memory_space<smem>>
    %c1 = arith.constant 1 : index
    %1 = memref.load %arg0[%c1] : memref<27xf32, #tpu.memory_space<smem>>
    %c2 = arith.constant 2 : index
    %2 = memref.load %arg0[%c2] : memref<27xf32, #tpu.memory_space<smem>>
    %c3 = arith.constant 3 : index
    %3 = memref.load %arg0[%c3] : memref<27xf32, #tpu.memory_space<smem>>
    %c4 = arith.constant 4 : index
    %4 = memref.load %arg0[%c4] : memref<27xf32, #tpu.memory_space<smem>>
    %c5 = arith.constant 5 : index
    %5 = memref.load %arg0[%c5] : memref<27xf32, #tpu.memory_space<smem>>
    %c6 = arith.constant 6 : index
    %6 = memref.load %arg0[%c6] : memref<27xf32, #tpu.memory_space<smem>>
    %c7 = arith.constant 7 : index
    %7 = memref.load %arg0[%c7] : memref<27xf32, #tpu.memory_space<smem>>
    %c8 = arith.constant 8 : index
    %8 = memref.load %arg0[%c8] : memref<27xf32, #tpu.memory_space<smem>>
    %c9 = arith.constant 9 : index
    %9 = memref.load %arg0[%c9] : memref<27xf32, #tpu.memory_space<smem>>
    %c10 = arith.constant 10 : index
    %10 = memref.load %arg0[%c10] : memref<27xf32, #tpu.memory_space<smem>>
    %c11 = arith.constant 11 : index
    %11 = memref.load %arg0[%c11] : memref<27xf32, #tpu.memory_space<smem>>
    %c12 = arith.constant 12 : index
    %12 = memref.load %arg0[%c12] : memref<27xf32, #tpu.memory_space<smem>>
    %c13 = arith.constant 13 : index
    %13 = memref.load %arg0[%c13] : memref<27xf32, #tpu.memory_space<smem>>
    %c14 = arith.constant 14 : index
    %14 = memref.load %arg0[%c14] : memref<27xf32, #tpu.memory_space<smem>>
    %c15 = arith.constant 15 : index
    %15 = memref.load %arg0[%c15] : memref<27xf32, #tpu.memory_space<smem>>
    %c16 = arith.constant 16 : index
    %16 = memref.load %arg0[%c16] : memref<27xf32, #tpu.memory_space<smem>>
    %c17 = arith.constant 17 : index
    %17 = memref.load %arg0[%c17] : memref<27xf32, #tpu.memory_space<smem>>
    %c18 = arith.constant 18 : index
    %18 = memref.load %arg0[%c18] : memref<27xf32, #tpu.memory_space<smem>>
    %c19 = arith.constant 19 : index
    %19 = memref.load %arg0[%c19] : memref<27xf32, #tpu.memory_space<smem>>
    %c20 = arith.constant 20 : index
    %20 = memref.load %arg0[%c20] : memref<27xf32, #tpu.memory_space<smem>>
    %c21 = arith.constant 21 : index
    %21 = memref.load %arg0[%c21] : memref<27xf32, #tpu.memory_space<smem>>
    %c22 = arith.constant 22 : index
    %22 = memref.load %arg0[%c22] : memref<27xf32, #tpu.memory_space<smem>>
    %c23 = arith.constant 23 : index
    %23 = memref.load %arg0[%c23] : memref<27xf32, #tpu.memory_space<smem>>
    %c24 = arith.constant 24 : index
    %24 = memref.load %arg0[%c24] : memref<27xf32, #tpu.memory_space<smem>>
    %c25 = arith.constant 25 : index
    %25 = memref.load %arg0[%c25] : memref<27xf32, #tpu.memory_space<smem>>
    %c26 = arith.constant 26 : index
    %26 = memref.load %arg0[%c26] : memref<27xf32, #tpu.memory_space<smem>>
    %c0_0 = arith.constant 0 : index
    %27 = memref.load %arg1[%c0_0] : memref<1xf32, #tpu.memory_space<smem>>
    %28 = vector.broadcast %27 : f32 to vector<16x16xf32>
    %cst = arith.constant 0.000000e+00 : f32
    %29 = vector.broadcast %cst : f32 to vector<16x16xf32>
    %cst_1 = arith.constant 0.000000e+00 : f32
    %30 = vector.broadcast %cst_1 : f32 to vector<16x16xf32>
    %cst_2 = arith.constant 0.000000e+00 : f32
    %31 = vector.broadcast %cst_2 : f32 to vector<16x16xf32>
    %cst_3 = arith.constant 0.000000e+00 : f32
    %32 = vector.broadcast %cst_3 : f32 to vector<16x16xf32>
    %cst_4 = arith.constant 0.000000e+00 : f32
    %33 = vector.broadcast %cst_4 : f32 to vector<16x16xf32>
    %cst_5 = arith.constant 0.000000e+00 : f32
    %34 = vector.broadcast %cst_5 : f32 to vector<16x16xf32>
    %cst_6 = arith.constant 0.000000e+00 : f32
    %35 = vector.broadcast %cst_6 : f32 to vector<16x16xf32>
    %cst_7 = arith.constant 0.000000e+00 : f32
    %36 = vector.broadcast %cst_7 : f32 to vector<16x16xf32>
    %c0_8 = arith.constant 0 : index
    %c0_9 = arith.constant 0 : index
    %c0_10 = arith.constant 0 : index
    %c0_11 = arith.constant 0 : index
    %37 = vector.load %arg2[%c0_8, %c0_9, %c0_10, %c0_11] : memref<2x3x16x16xf32, #tpu.memory_space<vmem>>, vector<1x1x16x16xf32>
    %38 = vector.shape_cast %37 : vector<1x1x16x16xf32> to vector<16x16xf32>
    %39 = vector.broadcast %0 : f32 to vector<16x16xf32>
    %40 = arith.mulf %39, %38 : vector<16x16xf32>
    %41 = arith.addf %28, %40 : vector<16x16xf32>
    %42 = vector.broadcast %1 : f32 to vector<16x16xf32>
    %43 = arith.mulf %42, %38 : vector<16x16xf32>
    %44 = arith.addf %29, %43 : vector<16x16xf32>
    %45 = vector.broadcast %2 : f32 to vector<16x16xf32>
    %46 = arith.mulf %45, %38 : vector<16x16xf32>
    %47 = arith.addf %30, %46 : vector<16x16xf32>
    %48 = vector.broadcast %3 : f32 to vector<16x16xf32>
    %49 = arith.mulf %48, %38 : vector<16x16xf32>
    %50 = arith.addf %31, %49 : vector<16x16xf32>
    %51 = vector.broadcast %4 : f32 to vector<16x16xf32>
    %52 = arith.mulf %51, %38 : vector<16x16xf32>
    %53 = arith.addf %32, %52 : vector<16x16xf32>
    %54 = vector.broadcast %5 : f32 to vector<16x16xf32>
    %55 = arith.mulf %54, %38 : vector<16x16xf32>
    %56 = arith.addf %33, %55 : vector<16x16xf32>
    %57 = vector.broadcast %6 : f32 to vector<16x16xf32>
    %58 = arith.mulf %57, %38 : vector<16x16xf32>
    %59 = arith.addf %34, %58 : vector<16x16xf32>
    %60 = vector.broadcast %7 : f32 to vector<16x16xf32>
    %61 = arith.mulf %60, %38 : vector<16x16xf32>
    %62 = arith.addf %35, %61 : vector<16x16xf32>
    %63 = vector.broadcast %8 : f32 to vector<16x16xf32>
    %64 = arith.mulf %63, %38 : vector<16x16xf32>
    %65 = arith.addf %36, %64 : vector<16x16xf32>
    %c0_12 = arith.constant 0 : index
    %c1_13 = arith.constant 1 : index
    %c0_14 = arith.constant 0 : index
    %c0_15 = arith.constant 0 : index
    %66 = vector.load %arg2[%c0_12, %c1_13, %c0_14, %c0_15] : memref<2x3x16x16xf32, #tpu.memory_space<vmem>>, vector<1x1x16x16xf32>
    %67 = vector.shape_cast %66 : vector<1x1x16x16xf32> to vector<16x16xf32>
    %68 = vector.broadcast %9 : f32 to vector<16x16xf32>
    %69 = arith.mulf %68, %67 : vector<16x16xf32>
    %70 = arith.addf %41, %69 : vector<16x16xf32>
    %71 = vector.broadcast %10 : f32 to vector<16x16xf32>
    %72 = arith.mulf %71, %67 : vector<16x16xf32>
    %73 = arith.addf %44, %72 : vector<16x16xf32>
    %74 = vector.broadcast %11 : f32 to vector<16x16xf32>
    %75 = arith.mulf %74, %67 : vector<16x16xf32>
    %76 = arith.addf %47, %75 : vector<16x16xf32>
    %77 = vector.broadcast %12 : f32 to vector<16x16xf32>
    %78 = arith.mulf %77, %67 : vector<16x16xf32>
    %79 = arith.addf %50, %78 : vector<16x16xf32>
    %80 = vector.broadcast %13 : f32 to vector<16x16xf32>
    %81 = arith.mulf %80, %67 : vector<16x16xf32>
    %82 = arith.addf %53, %81 : vector<16x16xf32>
    %83 = vector.broadcast %14 : f32 to vector<16x16xf32>
    %84 = arith.mulf %83, %67 : vector<16x16xf32>
    %85 = arith.addf %56, %84 : vector<16x16xf32>
    %86 = vector.broadcast %15 : f32 to vector<16x16xf32>
    %87 = arith.mulf %86, %67 : vector<16x16xf32>
    %88 = arith.addf %59, %87 : vector<16x16xf32>
    %89 = vector.broadcast %16 : f32 to vector<16x16xf32>
    %90 = arith.mulf %89, %67 : vector<16x16xf32>
    %91 = arith.addf %62, %90 : vector<16x16xf32>
    %92 = vector.broadcast %17 : f32 to vector<16x16xf32>
    %93 = arith.mulf %92, %67 : vector<16x16xf32>
    %94 = arith.addf %65, %93 : vector<16x16xf32>
    %c0_16 = arith.constant 0 : index
    %c2_17 = arith.constant 2 : index
    %c0_18 = arith.constant 0 : index
    %c0_19 = arith.constant 0 : index
    %95 = vector.load %arg2[%c0_16, %c2_17, %c0_18, %c0_19] : memref<2x3x16x16xf32, #tpu.memory_space<vmem>>, vector<1x1x16x16xf32>
    %96 = vector.shape_cast %95 : vector<1x1x16x16xf32> to vector<16x16xf32>
    %97 = vector.broadcast %18 : f32 to vector<16x16xf32>
    %98 = arith.mulf %97, %96 : vector<16x16xf32>
    %99 = arith.addf %70, %98 : vector<16x16xf32>
    %100 = vector.broadcast %19 : f32 to vector<16x16xf32>
    %101 = arith.mulf %100, %96 : vector<16x16xf32>
    %102 = arith.addf %73, %101 : vector<16x16xf32>
    %103 = vector.broadcast %20 : f32 to vector<16x16xf32>
    %104 = arith.mulf %103, %96 : vector<16x16xf32>
    %105 = arith.addf %76, %104 : vector<16x16xf32>
    %106 = vector.broadcast %21 : f32 to vector<16x16xf32>
    %107 = arith.mulf %106, %96 : vector<16x16xf32>
    %108 = arith.addf %79, %107 : vector<16x16xf32>
    %109 = vector.broadcast %22 : f32 to vector<16x16xf32>
    %110 = arith.mulf %109, %96 : vector<16x16xf32>
    %111 = arith.addf %82, %110 : vector<16x16xf32>
    %112 = vector.broadcast %23 : f32 to vector<16x16xf32>
    %113 = arith.mulf %112, %96 : vector<16x16xf32>
    %114 = arith.addf %85, %113 : vector<16x16xf32>
    %115 = vector.broadcast %24 : f32 to vector<16x16xf32>
    %116 = arith.mulf %115, %96 : vector<16x16xf32>
    %117 = arith.addf %88, %116 : vector<16x16xf32>
    %118 = vector.broadcast %25 : f32 to vector<16x16xf32>
    %119 = arith.mulf %118, %96 : vector<16x16xf32>
    %120 = arith.addf %91, %119 : vector<16x16xf32>
    %121 = vector.broadcast %26 : f32 to vector<16x16xf32>
    %122 = arith.mulf %121, %96 : vector<16x16xf32>
    %123 = arith.addf %94, %122 : vector<16x16xf32>
    %124 = vector.extract_strided_slice %99 {offsets = [0, 0], sizes = [14, 14], strides = [1, 1]} : vector<16x16xf32> to vector<14x14xf32>
    %125 = vector.extract_strided_slice %102 {offsets = [0, 1], sizes = [14, 14], strides = [1, 1]} : vector<16x16xf32> to vector<14x14xf32>
    %126 = vector.extract_strided_slice %105 {offsets = [0, 2], sizes = [14, 14], strides = [1, 1]} : vector<16x16xf32> to vector<14x14xf32>
    %127 = vector.extract_strided_slice %108 {offsets = [1, 0], sizes = [14, 14], strides = [1, 1]} : vector<16x16xf32> to vector<14x14xf32>
    %128 = vector.extract_strided_slice %111 {offsets = [1, 1], sizes = [14, 14], strides = [1, 1]} : vector<16x16xf32> to vector<14x14xf32>
    %129 = vector.extract_strided_slice %114 {offsets = [1, 2], sizes = [14, 14], strides = [1, 1]} : vector<16x16xf32> to vector<14x14xf32>
    %130 = vector.extract_strided_slice %117 {offsets = [2, 0], sizes = [14, 14], strides = [1, 1]} : vector<16x16xf32> to vector<14x14xf32>
    %131 = vector.extract_strided_slice %120 {offsets = [2, 1], sizes = [14, 14], strides = [1, 1]} : vector<16x16xf32> to vector<14x14xf32>
    %132 = vector.extract_strided_slice %123 {offsets = [2, 2], sizes = [14, 14], strides = [1, 1]} : vector<16x16xf32> to vector<14x14xf32>
    %133 = arith.addf %124, %125 : vector<14x14xf32>
    %134 = arith.addf %126, %127 : vector<14x14xf32>
    %135 = arith.addf %128, %129 : vector<14x14xf32>
    %136 = arith.addf %130, %131 : vector<14x14xf32>
    %137 = arith.addf %133, %134 : vector<14x14xf32>
    %138 = arith.addf %135, %136 : vector<14x14xf32>
    %139 = arith.addf %137, %138 : vector<14x14xf32>
    %140 = arith.addf %139, %132 : vector<14x14xf32>
    %c0_20 = arith.constant 0 : index
    %c0_21 = arith.constant 0 : index
    %c0_22 = arith.constant 0 : index
    %c0_23 = arith.constant 0 : index
    %141 = vector.load %arg3[%c0_20, %c0_21, %c0_22, %c0_23] : memref<2x1x14x14xf32, #tpu.memory_space<vmem>>, vector<1x1x14x14xf32>
    %142 = vector.shape_cast %141 : vector<1x1x14x14xf32> to vector<14x14xf32>
    %143 = vector.shape_cast %140 : vector<14x14xf32> to vector<1x1x14x14xf32>
    tpu.vector_store %arg3[%c0_20, %c0_21, %c0_22, %c0_23], %143 {strides = array<i32>} : memref<2x1x14x14xf32, #tpu.memory_space<vmem>>, vector<1x1x14x14xf32>,
    %144 = vector.broadcast %27 : f32 to vector<16x16xf32>
    %cst_24 = arith.constant 0.000000e+00 : f32
    %145 = vector.broadcast %cst_24 : f32 to vector<16x16xf32>
    %cst_25 = arith.constant 0.000000e+00 : f32
    %146 = vector.broadcast %cst_25 : f32 to vector<16x16xf32>
    %cst_26 = arith.constant 0.000000e+00 : f32
    %147 = vector.broadcast %cst_26 : f32 to vector<16x16xf32>
    %cst_27 = arith.constant 0.000000e+00 : f32
    %148 = vector.broadcast %cst_27 : f32 to vector<16x16xf32>
    %cst_28 = arith.constant 0.000000e+00 : f32
    %149 = vector.broadcast %cst_28 : f32 to vector<16x16xf32>
    %cst_29 = arith.constant 0.000000e+00 : f32
    %150 = vector.broadcast %cst_29 : f32 to vector<16x16xf32>
    %cst_30 = arith.constant 0.000000e+00 : f32
    %151 = vector.broadcast %cst_30 : f32 to vector<16x16xf32>
    %cst_31 = arith.constant 0.000000e+00 : f32
    %152 = vector.broadcast %cst_31 : f32 to vector<16x16xf32>
    %c1_32 = arith.constant 1 : index
    %c0_33 = arith.constant 0 : index
    %c0_34 = arith.constant 0 : index
    %c0_35 = arith.constant 0 : index
    %153 = vector.load %arg2[%c1_32, %c0_33, %c0_34, %c0_35] : memref<2x3x16x16xf32, #tpu.memory_space<vmem>>, vector<1x1x16x16xf32>
    %154 = vector.shape_cast %153 : vector<1x1x16x16xf32> to vector<16x16xf32>
    %155 = vector.broadcast %0 : f32 to vector<16x16xf32>
    %156 = arith.mulf %155, %154 : vector<16x16xf32>
    %157 = arith.addf %144, %156 : vector<16x16xf32>
    %158 = vector.broadcast %1 : f32 to vector<16x16xf32>
    %159 = arith.mulf %158, %154 : vector<16x16xf32>
    %160 = arith.addf %145, %159 : vector<16x16xf32>
    %161 = vector.broadcast %2 : f32 to vector<16x16xf32>
    %162 = arith.mulf %161, %154 : vector<16x16xf32>
    %163 = arith.addf %146, %162 : vector<16x16xf32>
    %164 = vector.broadcast %3 : f32 to vector<16x16xf32>
    %165 = arith.mulf %164, %154 : vector<16x16xf32>
    %166 = arith.addf %147, %165 : vector<16x16xf32>
    %167 = vector.broadcast %4 : f32 to vector<16x16xf32>
    %168 = arith.mulf %167, %154 : vector<16x16xf32>
    %169 = arith.addf %148, %168 : vector<16x16xf32>
    %170 = vector.broadcast %5 : f32 to vector<16x16xf32>
    %171 = arith.mulf %170, %154 : vector<16x16xf32>
    %172 = arith.addf %149, %171 : vector<16x16xf32>
    %173 = vector.broadcast %6 : f32 to vector<16x16xf32>
    %174 = arith.mulf %173, %154 : vector<16x16xf32>
    %175 = arith.addf %150, %174 : vector<16x16xf32>
    %176 = vector.broadcast %7 : f32 to vector<16x16xf32>
    %177 = arith.mulf %176, %154 : vector<16x16xf32>
    %178 = arith.addf %151, %177 : vector<16x16xf32>
    %179 = vector.broadcast %8 : f32 to vector<16x16xf32>
    %180 = arith.mulf %179, %154 : vector<16x16xf32>
    %181 = arith.addf %152, %180 : vector<16x16xf32>
    %c1_36 = arith.constant 1 : index
    %c1_37 = arith.constant 1 : index
    %c0_38 = arith.constant 0 : index
    %c0_39 = arith.constant 0 : index
    %182 = vector.load %arg2[%c1_36, %c1_37, %c0_38, %c0_39] : memref<2x3x16x16xf32, #tpu.memory_space<vmem>>, vector<1x1x16x16xf32>
    %183 = vector.shape_cast %182 : vector<1x1x16x16xf32> to vector<16x16xf32>
    %184 = vector.broadcast %9 : f32 to vector<16x16xf32>
    %185 = arith.mulf %184, %183 : vector<16x16xf32>
    %186 = arith.addf %157, %185 : vector<16x16xf32>
    %187 = vector.broadcast %10 : f32 to vector<16x16xf32>
    %188 = arith.mulf %187, %183 : vector<16x16xf32>
    %189 = arith.addf %160, %188 : vector<16x16xf32>
    %190 = vector.broadcast %11 : f32 to vector<16x16xf32>
    %191 = arith.mulf %190, %183 : vector<16x16xf32>
    %192 = arith.addf %163, %191 : vector<16x16xf32>
    %193 = vector.broadcast %12 : f32 to vector<16x16xf32>
    %194 = arith.mulf %193, %183 : vector<16x16xf32>
    %195 = arith.addf %166, %194 : vector<16x16xf32>
    %196 = vector.broadcast %13 : f32 to vector<16x16xf32>
    %197 = arith.mulf %196, %183 : vector<16x16xf32>
    %198 = arith.addf %169, %197 : vector<16x16xf32>
    %199 = vector.broadcast %14 : f32 to vector<16x16xf32>
    %200 = arith.mulf %199, %183 : vector<16x16xf32>
    %201 = arith.addf %172, %200 : vector<16x16xf32>
    %202 = vector.broadcast %15 : f32 to vector<16x16xf32>
    %203 = arith.mulf %202, %183 : vector<16x16xf32>
    %204 = arith.addf %175, %203 : vector<16x16xf32>
    %205 = vector.broadcast %16 : f32 to vector<16x16xf32>
    %206 = arith.mulf %205, %183 : vector<16x16xf32>
    %207 = arith.addf %178, %206 : vector<16x16xf32>
    %208 = vector.broadcast %17 : f32 to vector<16x16xf32>
    %209 = arith.mulf %208, %183 : vector<16x16xf32>
    %210 = arith.addf %181, %209 : vector<16x16xf32>
    %c1_40 = arith.constant 1 : index
    %c2_41 = arith.constant 2 : index
    %c0_42 = arith.constant 0 : index
    %c0_43 = arith.constant 0 : index
    %211 = vector.load %arg2[%c1_40, %c2_41, %c0_42, %c0_43] : memref<2x3x16x16xf32, #tpu.memory_space<vmem>>, vector<1x1x16x16xf32>
    %212 = vector.shape_cast %211 : vector<1x1x16x16xf32> to vector<16x16xf32>
    %213 = vector.broadcast %18 : f32 to vector<16x16xf32>
    %214 = arith.mulf %213, %212 : vector<16x16xf32>
    %215 = arith.addf %186, %214 : vector<16x16xf32>
    %216 = vector.broadcast %19 : f32 to vector<16x16xf32>
    %217 = arith.mulf %216, %212 : vector<16x16xf32>
    %218 = arith.addf %189, %217 : vector<16x16xf32>
    %219 = vector.broadcast %20 : f32 to vector<16x16xf32>
    %220 = arith.mulf %219, %212 : vector<16x16xf32>
    %221 = arith.addf %192, %220 : vector<16x16xf32>
    %222 = vector.broadcast %21 : f32 to vector<16x16xf32>
    %223 = arith.mulf %222, %212 : vector<16x16xf32>
    %224 = arith.addf %195, %223 : vector<16x16xf32>
    %225 = vector.broadcast %22 : f32 to vector<16x16xf32>
    %226 = arith.mulf %225, %212 : vector<16x16xf32>
    %227 = arith.addf %198, %226 : vector<16x16xf32>
    %228 = vector.broadcast %23 : f32 to vector<16x16xf32>
    %229 = arith.mulf %228, %212 : vector<16x16xf32>
    %230 = arith.addf %201, %229 : vector<16x16xf32>
    %231 = vector.broadcast %24 : f32 to vector<16x16xf32>
    %232 = arith.mulf %231, %212 : vector<16x16xf32>
    %233 = arith.addf %204, %232 : vector<16x16xf32>
    %234 = vector.broadcast %25 : f32 to vector<16x16xf32>
    %235 = arith.mulf %234, %212 : vector<16x16xf32>
    %236 = arith.addf %207, %235 : vector<16x16xf32>
    %237 = vector.broadcast %26 : f32 to vector<16x16xf32>
    %238 = arith.mulf %237, %212 : vector<16x16xf32>
    %239 = arith.addf %210, %238 : vector<16x16xf32>
    %240 = vector.extract_strided_slice %215 {offsets = [0, 0], sizes = [14, 14], strides = [1, 1]} : vector<16x16xf32> to vector<14x14xf32>
    %241 = vector.extract_strided_slice %218 {offsets = [0, 1], sizes = [14, 14], strides = [1, 1]} : vector<16x16xf32> to vector<14x14xf32>
    %242 = vector.extract_strided_slice %221 {offsets = [0, 2], sizes = [14, 14], strides = [1, 1]} : vector<16x16xf32> to vector<14x14xf32>
    %243 = vector.extract_strided_slice %224 {offsets = [1, 0], sizes = [14, 14], strides = [1, 1]} : vector<16x16xf32> to vector<14x14xf32>
    %244 = vector.extract_strided_slice %227 {offsets = [1, 1], sizes = [14, 14], strides = [1, 1]} : vector<16x16xf32> to vector<14x14xf32>
    %245 = vector.extract_strided_slice %230 {offsets = [1, 2], sizes = [14, 14], strides = [1, 1]} : vector<16x16xf32> to vector<14x14xf32>
    %246 = vector.extract_strided_slice %233 {offsets = [2, 0], sizes = [14, 14], strides = [1, 1]} : vector<16x16xf32> to vector<14x14xf32>
    %247 = vector.extract_strided_slice %236 {offsets = [2, 1], sizes = [14, 14], strides = [1, 1]} : vector<16x16xf32> to vector<14x14xf32>
    %248 = vector.extract_strided_slice %239 {offsets = [2, 2], sizes = [14, 14], strides = [1, 1]} : vector<16x16xf32> to vector<14x14xf32>
    %249 = arith.addf %240, %241 : vector<14x14xf32>
    %250 = arith.addf %242, %243 : vector<14x14xf32>
    %251 = arith.addf %244, %245 : vector<14x14xf32>
    %252 = arith.addf %246, %247 : vector<14x14xf32>
    %253 = arith.addf %249, %250 : vector<14x14xf32>
    %254 = arith.addf %251, %252 : vector<14x14xf32>
    %255 = arith.addf %253, %254 : vector<14x14xf32>
    %256 = arith.addf %255, %248 : vector<14x14xf32>
    %c1_44 = arith.constant 1 : index
    %c0_45 = arith.constant 0 : index
    %c0_46 = arith.constant 0 : index
    %c0_47 = arith.constant 0 : index
    %257 = vector.load %arg3[%c1_44, %c0_45, %c0_46, %c0_47] : memref<2x1x14x14xf32, #tpu.memory_space<vmem>>, vector<1x1x14x14xf32>
    %258 = vector.shape_cast %257 : vector<1x1x14x14xf32> to vector<14x14xf32>
    %259 = vector.shape_cast %256 : vector<14x14xf32> to vector<1x1x14x14xf32>
    tpu.vector_store %arg3[%c1_44, %c0_45, %c0_46, %c0_47], %259 {strides = array<i32>} : memref<2x1x14x14xf32, #tpu.memory_space<vmem>>, vector<1x1x14x14xf32>,
    return
  }
}

</mosaic_0001>

<llo_original>
// kernel: conv2d_pallas.1
$region0: #{conv2d_pallas.1}
  #allocation0 [shape = 'u32[]', space=smem, size = 0x4, offset = 0x4, fixed_abs, tag = 'smem constant byte address 0x4 - core index']
  #allocation1 [shape = 'u32[72,128]{1,0:T(1,128)}', space=vmem, size = 0x9000, scoped, tag = 'internal scratch']
  #allocation2 [shape = 'f32[1]{0:T(128)S(6)}', space=smem, size = 0x200, scoped, tag = 'scoped memory for conv2d_pallas.1']
  %s0 = inlined_call_operand.vmem [shape: f32[27], index: 0, kind: input, shape index: {}]
  %s1 = inlined_call_operand.<no memory space> [shape: f32[1], index: 1, kind: input, shape index: {}]
  %s2 = inlined_call_operand.hbm [shape: f32[2,3,16,16], index: 2, kind: input, shape index: {}]
  %s3 = inlined_call_operand.vmem [shape: f32[2,1,14,14], index: 3, kind: output, shape index: {}]
  %s4 = sld [smem:[#allocation0]]
  $region30: #{conv2d_pallas.1} parent=0
    _
  %s6 = ssub.s32 1, %s4
  %s7 = scalar_select 0, %s6, %s4
  %8 = sst [smem:[#allocation2]] %s1
  $region1: #{conv2d_pallas.1} parent=0
    #allocation3 [shape = 'u8[512]{0}', space=smem, size = 0x200, scoped, tag = 'input window, operand 0, single buffered']
    #allocation4 [shape = 's32[1]{0}', space=sflag, size = 0x4, scoped, tag = 'scoped memory for conv2d_pallas.1']
    #allocation5 [shape = 's32[1]{0}', space=sflag, size = 0x4, scoped, tag = 'scoped memory for conv2d_pallas.1']
    #allocation6 [shape = 'u8[49152]{0}', space=vmem, size = 0xc000, scoped, tag = 'input window, operand 2, single buffered']
    %9 = vsyncpa [#allocation5], 0
    %10 = vsyncpa [#allocation4], 0
    // Predicated region
    $region2: #{conv2d_pallas.1} parent=1 // pred_check
      _
    $region3: #{conv2d_pallas.1} parent=1 // pred_check_branch
      %12 = sbr.rel (0) target = $region5
    $region4: #{conv2d_pallas.1} parent=1 // pred_region
      %14 = vsyncadd [#allocation5], 0
      %s16 = sshll.u32 %s0, 4
      %s17 = int_to_ptr.vmem [resolvable:$true] %s16
      %19 = dma.vmem_to_smem %s17, 16, [#allocation3], [#allocation5]
    $region5: #{conv2d_pallas.1} parent=1 // pred_fallthru
      _
    // Predicated region
    $region6: #{conv2d_pallas.1} parent=1 // pred_check
      _
    $region7: #{conv2d_pallas.1} parent=1 // pred_check_branch
      %21 = sbr.rel (0) target = $region9
    $region8: #{conv2d_pallas.1} parent=1 // pred_region
      _
    $region9: #{conv2d_pallas.1} parent=1 // pred_fallthru
      _
    // Predicated region
    $region10: #{conv2d_pallas.1} parent=1 // pred_check
      _
    $region11: #{conv2d_pallas.1} parent=1 // pred_check_branch
      %23 = sbr.rel (0) target = $region13
    $region12: #{conv2d_pallas.1} parent=1 // pred_region
      %25 = vsyncadd [#allocation4], 0
      %s26 = sshll.u32 %s2, 4
      %s27 = int_to_ptr.hbm [resolvable:$true] %s26
      %s28 = sshll.u32 [#allocation6], 4
      %s29 = int_to_ptr.vmem [resolvable:$true] %s28
      %34 = dma.hbm_to_vmem [thread:$0]  %s27, 1536, %s29, [#allocation4], 128, 128, 8
    $region13: #{conv2d_pallas.1} parent=1 // pred_fallthru
      _
    // Predicated region
    $region14: #{conv2d_pallas.1} parent=1 // pred_check
      _
    $region15: #{conv2d_pallas.1} parent=1 // pred_check_branch
      %36 = sbr.rel (0) target = $region17
    $region16: #{conv2d_pallas.1} parent=1 // pred_region
      %38 = dma.done [#allocation5], 16
    $region17: #{conv2d_pallas.1} parent=1 // pred_fallthru
      _
    // Predicated region
    $region18: #{conv2d_pallas.1} parent=1 // pred_check
      _
    $region19: #{conv2d_pallas.1} parent=1 // pred_check_branch
      %40 = sbr.rel (0) target = $region21
    $region20: #{conv2d_pallas.1} parent=1 // pred_region
      %42 = dma.done [#allocation4], 1536
    $region21: #{conv2d_pallas.1} parent=1 // pred_fallthru
      _
    %43 = sfence
    %s44 = sld [smem:[#allocation3]]
    %s45 = sld [smem:[#allocation3 + $0x1]]
    %s46 = sld [smem:[#allocation3 + $0x2]]
    %s47 = sld [smem:[#allocation3 + $0x3]]
    %s48 = sld [smem:[#allocation3 + $0x4]]
    %s49 = sld [smem:[#allocation3 + $0x5]]
    %s50 = sld [smem:[#allocation3 + $0x6]]
    %s51 = sld [smem:[#allocation3 + $0x7]]
    %s52 = sld [smem:[#allocation3 + $0x8]]
    %s53 = sld [smem:[#allocation3 + $0x9]]
    %s54 = sld [smem:[#allocation3 + $0xa]]
    %s55 = sld [smem:[#allocation3 + $0xb]]
    %s56 = sld [smem:[#allocation3 + $0xc]]
    %s57 = sld [smem:[#allocation3 + $0xd]]
    %s58 = sld [smem:[#allocation3 + $0xe]]
    %s59 = sld [smem:[#allocation3 + $0xf]]
    %s60 = sld [smem:[#allocation3 + $0x10]]
    %s61 = sld [smem:[#allocation3 + $0x11]]
    %s62 = sld [smem:[#allocation3 + $0x12]]
    %s63 = sld [smem:[#allocation3 + $0x13]]
    %s64 = sld [smem:[#allocation3 + $0x14]]
    %s65 = sld [smem:[#allocation3 + $0x15]]
    %s66 = sld [smem:[#allocation3 + $0x16]]
    %s67 = sld [smem:[#allocation3 + $0x17]]
    %s68 = sld [smem:[#allocation3 + $0x18]]
    %s69 = sld [smem:[#allocation3 + $0x19]]
    %s70 = sld [smem:[#allocation3 + $0x1a]]
    %s71 = sld [smem:[#allocation2]]
    %v72 = vstv %s71
    %v73 = vld [vmem:[#allocation6] sm:$0xff]
    %v74 = vld [vmem:[#allocation6 + $0x8] sm:$0xff]
    %v75 = vstv %s44
    %v76 = vmul.f32 %v75, %v73
    %v77 = vmul.f32 %v75, %v74
    %v78 = vadd.f32 %v72, %v76
    %v79 = vadd.f32 %v72, %v77
    %v80 = vstv %s45
    %v81 = vmul.f32 %v80, %v73
    %v82 = vmul.f32 %v80, %v74
    %v83 = vadd.f32 %v81, 0.0
    %v84 = vadd.f32 %v82, 0.0
    %v85 = vstv %s46
    %v86 = vmul.f32 %v85, %v73
    %v87 = vmul.f32 %v85, %v74
    %v88 = vadd.f32 %v86, 0.0
    %v89 = vadd.f32 %v87, 0.0
    %v90 = vstv %s47
    %v91 = vmul.f32 %v90, %v73
    %v92 = vmul.f32 %v90, %v74
    %v93 = vadd.f32 %v91, 0.0
    %v94 = vadd.f32 %v92, 0.0
    %v95 = vstv %s48
    %v96 = vmul.f32 %v95, %v73
    %v97 = vmul.f32 %v95, %v74
    %v98 = vadd.f32 %v96, 0.0
    %v99 = vadd.f32 %v97, 0.0
    %v100 = vstv %s49
    %v101 = vmul.f32 %v100, %v73
    %v102 = vmul.f32 %v100, %v74
    %v103 = vadd.f32 %v101, 0.0
    %v104 = vadd.f32 %v102, 0.0
    %v105 = vstv %s50
    %v106 = vmul.f32 %v105, %v73
    %v107 = vmul.f32 %v105, %v74
    %v108 = vadd.f32 %v106, 0.0
    %v109 = vadd.f32 %v107, 0.0
    %v110 = vstv %s51
    %v111 = vmul.f32 %v110, %v73
    %v112 = vmul.f32 %v110, %v74
    %v113 = vadd.f32 %v111, 0.0
    %v114 = vadd.f32 %v112, 0.0
    %v115 = vstv %s52
    %v116 = vmul.f32 %v115, %v73
    %v117 = vmul.f32 %v115, %v74
    %v118 = vadd.f32 %v116, 0.0
    %v119 = vadd.f32 %v117, 0.0
    %s120 = scalar_lea.vmem [#allocation6], 16
    %v121 = vld [vmem:[%s120] sm:$0xff]
    %v122 = vld [vmem:[%s120 + $0x8] sm:$0xff]
    %v123 = vstv %s53
    %v124 = vmul.f32 %v123, %v121
    %v125 = vmul.f32 %v123, %v122
    %v126 = vadd.f32 %v78, %v124
    %v127 = vadd.f32 %v79, %v125
    %v128 = vstv %s54
    %v129 = vmul.f32 %v128, %v121
    %v130 = vmul.f32 %v128, %v122
    %v131 = vadd.f32 %v83, %v129
    %v132 = vadd.f32 %v84, %v130
    %v133 = vstv %s55
    %v134 = vmul.f32 %v133, %v121
    %v135 = vmul.f32 %v133, %v122
    %v136 = vadd.f32 %v88, %v134
    %v137 = vadd.f32 %v89, %v135
    %v138 = vstv %s56
    %v139 = vmul.f32 %v138, %v121
    %v140 = vmul.f32 %v138, %v122
    %v141 = vadd.f32 %v93, %v139
    %v142 = vadd.f32 %v94, %v140
    %v143 = vstv %s57
    %v144 = vmul.f32 %v143, %v121
    %v145 = vmul.f32 %v143, %v122
    %v146 = vadd.f32 %v98, %v144
    %v147 = vadd.f32 %v99, %v145
    %v148 = vstv %s58
    %v149 = vmul.f32 %v148, %v121
    %v150 = vmul.f32 %v148, %v122
    %v151 = vadd.f32 %v103, %v149
    %v152 = vadd.f32 %v104, %v150
    %v153 = vstv %s59
    %v154 = vmul.f32 %v153, %v121
    %v155 = vmul.f32 %v153, %v122
    %v156 = vadd.f32 %v108, %v154
    %v157 = vadd.f32 %v109, %v155
    %v158 = vstv %s60
    %v159 = vmul.f32 %v158, %v121
    %v160 = vmul.f32 %v158, %v122
    %v161 = vadd.f32 %v113, %v159
    %v162 = vadd.f32 %v114, %v160
    %v163 = vstv %s61
    %v164 = vmul.f32 %v163, %v121
    %v165 = vmul.f32 %v163, %v122
    %v166 = vadd.f32 %v118, %v164
    %v167 = vadd.f32 %v119, %v165
    %s168 = scalar_lea.vmem [#allocation6], 32
    %v169 = vld [vmem:[%s168] sm:$0xff]
    %v170 = vld [vmem:[%s168 + $0x8] sm:$0xff]
    %v171 = vstv %s62
    %v172 = vmul.f32 %v171, %v169
    %v173 = vmul.f32 %v171, %v170
    %v174 = vadd.f32 %v126, %v172
    %v175 = vadd.f32 %v127, %v173
    %v176 = vstv %s63
    %v177 = vmul.f32 %v176, %v169
    %v178 = vmul.f32 %v176, %v170
    %v179 = vadd.f32 %v131, %v177
    %v180 = vadd.f32 %v132, %v178
    %v181 = vstv %s64
    %v182 = vmul.f32 %v181, %v169
    %v183 = vmul.f32 %v181, %v170
    %v184 = vadd.f32 %v136, %v182
    %v185 = vadd.f32 %v137, %v183
    %v186 = vstv %s65
    %v187 = vmul.f32 %v186, %v169
    %v188 = vmul.f32 %v186, %v170
    %v189 = vadd.f32 %v141, %v187
    %v190 = vadd.f32 %v142, %v188
    %v191 = vstv %s66
    %v192 = vmul.f32 %v191, %v169
    %v193 = vmul.f32 %v191, %v170
    %v194 = vadd.f32 %v146, %v192
    %v195 = vadd.f32 %v147, %v193
    %v196 = vstv %s67
    %v197 = vmul.f32 %v196, %v169
    %v198 = vmul.f32 %v196, %v170
    %v199 = vadd.f32 %v151, %v197
    %v200 = vadd.f32 %v152, %v198
    %v201 = vstv %s68
    %v202 = vmul.f32 %v201, %v169
    %v203 = vmul.f32 %v201, %v170
    %v204 = vadd.f32 %v156, %v202
    %v205 = vadd.f32 %v157, %v203
    %v206 = vstv %s69
    %v207 = vmul.f32 %v206, %v169
    %v208 = vmul.f32 %v206, %v170
    %v209 = vadd.f32 %v161, %v207
    %v210 = vadd.f32 %v162, %v208
    %v211 = vstv %s70
    %v212 = vmul.f32 %v211, %v169
    %v213 = vmul.f32 %v211, %v170
    %v214 = vadd.f32 %v166, %v212
    %v215 = vadd.f32 %v167, %v213
    %218 = vrot.lane.b32.xlu0 %v179, 127
    %v219 = vpop.permute.xlu0 %218
    %220 = vrot.lane.b32.xlu0 %v180, 127
    %v221 = vpop.permute.xlu0 %220
    %v224 = vadd.f32 %v174, %v219
    %v225 = vadd.f32 %v175, %v221
    %vm228 = vcmask 1046528
    %v229 = vrot.slane %v189, 1
    %v230 = vrot.slane %v190, 1
    %v231 = vsel %vm228, %v229, %v230
    %232 = vrot.lane.b32.xlu0 %v231, 2
    %v233 = vpop.permute.xlu0 %232
    %234 = vrot.lane.b32.xlu0 %v230, 2
    %v235 = vpop.permute.xlu0 %234
    %v238 = vadd.f32 %v184, %v233
    %v239 = vadd.f32 %v185, %v235
    %242 = vrot.lane.b32.xlu0 %v199, 127
    %v243 = vpop.permute.xlu0 %242
    %244 = vrot.lane.b32.xlu0 %v200, 127
    %v245 = vpop.permute.xlu0 %244
    %v248 = vadd.f32 %v194, %v243
    %v249 = vadd.f32 %v195, %v245
    %252 = vrot.lane.b32.xlu0 %v209, 127
    %v253 = vpop.permute.xlu0 %252
    %254 = vrot.lane.b32.xlu0 %v210, 127
    %v255 = vpop.permute.xlu0 %254
    %v258 = vadd.f32 %v204, %v253
    %v259 = vadd.f32 %v205, %v255
    %262 = vrot.lane.b32.xlu0 %v238, 126
    %v263 = vpop.permute.xlu0 %262
    %264 = vrot.lane.b32.xlu0 %v239, 126
    %v265 = vpop.permute.xlu0 %264
    %v268 = vadd.f32 %v224, %v263
    %v269 = vadd.f32 %v225, %v265
    %v272 = vrot.slane %v258, 1
    %v273 = vrot.slane %v259, 1
    %v274 = vsel %vm228, %v272, %v273
    %275 = vrot.lane.b32.xlu0 %v274, 1
    %v276 = vpop.permute.xlu0 %275
    %277 = vrot.lane.b32.xlu0 %v273, 1
    %v278 = vpop.permute.xlu0 %277
    %v281 = vadd.f32 %v248, %v276
    %v282 = vadd.f32 %v249, %v278
    %v285 = vrot.slane %v281, 1
    %v286 = vrot.slane %v282, 1
    %v287 = vsel %vm228, %v285, %v286
    %288 = vrot.lane.b32.xlu0 %v287, 127
    %v289 = vpop.permute.xlu0 %288
    %290 = vrot.lane.b32.xlu0 %v286, 127
    %v291 = vpop.permute.xlu0 %290
    %v294 = vadd.f32 %v268, %v289
    %v295 = vadd.f32 %v269, %v291
    %vm298 = vcmask 1045504
    %v299 = vrot.slane %v214, 2
    %v300 = vrot.slane %v215, 2
    %v301 = vsel %vm298, %v299, %v300
    %302 = vrot.lane.b32.xlu0 %v301, 126
    %v303 = vpop.permute.xlu0 %302
    %304 = vrot.lane.b32.xlu0 %v300, 126
    %v305 = vpop.permute.xlu0 %304
    %v308 = vadd.f32 %v294, %v303
    %v309 = vadd.f32 %v295, %v305
    %vm310 = vcmask 113664
    %311 = vst.msk [vmem:[%s3] sm:$0xff] %vm310, %v308
    %vm312 = vcmask 111616
    %313 = vst.msk [vmem:[%s3 + $0x8] sm:$0x3f] %vm312, %v309
    %s314 = scalar_lea.vmem [#allocation6], 48
    %v315 = vld [vmem:[%s314] sm:$0xff]
    %v316 = vld [vmem:[%s314 + $0x8] sm:$0xff]
    %v317 = vmul.f32 %v75, %v315
    %v318 = vmul.f32 %v75, %v316
    %v319 = vadd.f32 %v72, %v317
    %v320 = vadd.f32 %v72, %v318
    %v321 = vmul.f32 %v80, %v315
    %v322 = vmul.f32 %v80, %v316
    %v323 = vadd.f32 %v321, 0.0
    %v324 = vadd.f32 %v322, 0.0
    %v325 = vmul.f32 %v85, %v315
    %v326 = vmul.f32 %v85, %v316
    %v327 = vadd.f32 %v325, 0.0
    %v328 = vadd.f32 %v326, 0.0
    %v329 = vmul.f32 %v90, %v315
    %v330 = vmul.f32 %v90, %v316
    %v331 = vadd.f32 %v329, 0.0
    %v332 = vadd.f32 %v330, 0.0
    %v333 = vmul.f32 %v95, %v315
    %v334 = vmul.f32 %v95, %v316
    %v335 = vadd.f32 %v333, 0.0
    %v336 = vadd.f32 %v334, 0.0
    %v337 = vmul.f32 %v100, %v315
    %v338 = vmul.f32 %v100, %v316
    %v339 = vadd.f32 %v337, 0.0
    %v340 = vadd.f32 %v338, 0.0
    %v341 = vmul.f32 %v105, %v315
    %v342 = vmul.f32 %v105, %v316
    %v343 = vadd.f32 %v341, 0.0
    %v344 = vadd.f32 %v342, 0.0
    %v345 = vmul.f32 %v110, %v315
    %v346 = vmul.f32 %v110, %v316
    %v347 = vadd.f32 %v345, 0.0
    %v348 = vadd.f32 %v346, 0.0
    %v349 = vmul.f32 %v115, %v315
    %v350 = vmul.f32 %v115, %v316
    %v351 = vadd.f32 %v349, 0.0
    %v352 = vadd.f32 %v350, 0.0
    %s353 = scalar_lea.vmem [#allocation6], 64
    %v354 = vld [vmem:[%s353] sm:$0xff]
    %v355 = vld [vmem:[%s353 + $0x8] sm:$0xff]
    %v356 = vmul.f32 %v123, %v354
    %v357 = vmul.f32 %v123, %v355
    %v358 = vadd.f32 %v319, %v356
    %v359 = vadd.f32 %v320, %v357
    %v360 = vmul.f32 %v128, %v354
    %v361 = vmul.f32 %v128, %v355
    %v362 = vadd.f32 %v323, %v360
    %v363 = vadd.f32 %v324, %v361
    %v364 = vmul.f32 %v133, %v354
    %v365 = vmul.f32 %v133, %v355
    %v366 = vadd.f32 %v327, %v364
    %v367 = vadd.f32 %v328, %v365
    %v368 = vmul.f32 %v138, %v354
    %v369 = vmul.f32 %v138, %v355
    %v370 = vadd.f32 %v331, %v368
    %v371 = vadd.f32 %v332, %v369
    %v372 = vmul.f32 %v143, %v354
    %v373 = vmul.f32 %v143, %v355
    %v374 = vadd.f32 %v335, %v372
    %v375 = vadd.f32 %v336, %v373
    %v376 = vmul.f32 %v148, %v354
    %v377 = vmul.f32 %v148, %v355
    %v378 = vadd.f32 %v339, %v376
    %v379 = vadd.f32 %v340, %v377
    %v380 = vmul.f32 %v153, %v354
    %v381 = vmul.f32 %v153, %v355
    %v382 = vadd.f32 %v343, %v380
    %v383 = vadd.f32 %v344, %v381
    %v384 = vmul.f32 %v158, %v354
    %v385 = vmul.f32 %v158, %v355
    %v386 = vadd.f32 %v347, %v384
    %v387 = vadd.f32 %v348, %v385
    %v388 = vmul.f32 %v163, %v354
    %v389 = vmul.f32 %v163, %v355
    %v390 = vadd.f32 %v351, %v388
    %v391 = vadd.f32 %v352, %v389
    %s392 = scalar_lea.vmem [#allocation6], 80
    %v393 = vld [vmem:[%s392] sm:$0xff]
    %v394 = vld [vmem:[%s392 + $0x8] sm:$0xff]
    %v395 = vmul.f32 %v171, %v393
    %v396 = vmul.f32 %v171, %v394
    %v397 = vadd.f32 %v358, %v395
    %v398 = vadd.f32 %v359, %v396
    %v399 = vmul.f32 %v176, %v393
    %v400 = vmul.f32 %v176, %v394
    %v401 = vadd.f32 %v362, %v399
    %v402 = vadd.f32 %v363, %v400
    %v403 = vmul.f32 %v181, %v393
    %v404 = vmul.f32 %v181, %v394
    %v405 = vadd.f32 %v366, %v403
    %v406 = vadd.f32 %v367, %v404
    %v407 = vmul.f32 %v186, %v393
    %v408 = vmul.f32 %v186, %v394
    %v409 = vadd.f32 %v370, %v407
    %v410 = vadd.f32 %v371, %v408
    %v411 = vmul.f32 %v191, %v393
    %v412 = vmul.f32 %v191, %v394
    %v413 = vadd.f32 %v374, %v411
    %v414 = vadd.f32 %v375, %v412
    %v415 = vmul.f32 %v196, %v393
    %v416 = vmul.f32 %v196, %v394
    %v417 = vadd.f32 %v378, %v415
    %v418 = vadd.f32 %v379, %v416
    %v419 = vmul.f32 %v201, %v393
    %v420 = vmul.f32 %v201, %v394
    %v421 = vadd.f32 %v382, %v419
    %v422 = vadd.f32 %v383, %v420
    %v423 = vmul.f32 %v206, %v393
    %v424 = vmul.f32 %v206, %v394
    %v425 = vadd.f32 %v386, %v423
    %v426 = vadd.f32 %v387, %v424
    %v427 = vmul.f32 %v211, %v393
    %v428 = vmul.f32 %v211, %v394
    %v429 = vadd.f32 %v390, %v427
    %v430 = vadd.f32 %v391, %v428
    %433 = vrot.lane.b32.xlu0 %v401, 127
    %v434 = vpop.permute.xlu0 %433
    %435 = vrot.lane.b32.xlu0 %v402, 127
    %v436 = vpop.permute.xlu0 %435
    %v439 = vadd.f32 %v397, %v434
    %v440 = vadd.f32 %v398, %v436
    %v443 = vrot.slane %v409, 1
    %v444 = vrot.slane %v410, 1
    %v445 = vsel %vm228, %v443, %v444
    %446 = vrot.lane.b32.xlu0 %v445, 2
    %v447 = vpop.permute.xlu0 %446
    %448 = vrot.lane.b32.xlu0 %v444, 2
    %v449 = vpop.permute.xlu0 %448
    %v452 = vadd.f32 %v405, %v447
    %v453 = vadd.f32 %v406, %v449
    %456 = vrot.lane.b32.xlu0 %v417, 127
    %v457 = vpop.permute.xlu0 %456
    %458 = vrot.lane.b32.xlu0 %v418, 127
    %v459 = vpop.permute.xlu0 %458
    %v462 = vadd.f32 %v413, %v457
    %v463 = vadd.f32 %v414, %v459
    %466 = vrot.lane.b32.xlu0 %v425, 127
    %v467 = vpop.permute.xlu0 %466
    %468 = vrot.lane.b32.xlu0 %v426, 127
    %v469 = vpop.permute.xlu0 %468
    %v472 = vadd.f32 %v421, %v467
    %v473 = vadd.f32 %v422, %v469
    %476 = vrot.lane.b32.xlu0 %v452, 126
    %v477 = vpop.permute.xlu0 %476
    %478 = vrot.lane.b32.xlu0 %v453, 126
    %v479 = vpop.permute.xlu0 %478
    %v482 = vadd.f32 %v439, %v477
    %v483 = vadd.f32 %v440, %v479
    %v486 = vrot.slane %v472, 1
    %v487 = vrot.slane %v473, 1
    %v488 = vsel %vm228, %v486, %v487
    %489 = vrot.lane.b32.xlu0 %v488, 1
    %v490 = vpop.permute.xlu0 %489
    %491 = vrot.lane.b32.xlu0 %v487, 1
    %v492 = vpop.permute.xlu0 %491
    %v495 = vadd.f32 %v462, %v490
    %v496 = vadd.f32 %v463, %v492
    %v499 = vrot.slane %v495, 1
    %v500 = vrot.slane %v496, 1
    %v501 = vsel %vm228, %v499, %v500
    %502 = vrot.lane.b32.xlu0 %v501, 127
    %v503 = vpop.permute.xlu0 %502
    %504 = vrot.lane.b32.xlu0 %v500, 127
    %v505 = vpop.permute.xlu0 %504
    %v508 = vadd.f32 %v482, %v503
    %v509 = vadd.f32 %v483, %v505
    %v512 = vrot.slane %v429, 2
    %v513 = vrot.slane %v430, 2
    %v514 = vsel %vm298, %v512, %v513
    %515 = vrot.lane.b32.xlu0 %v514, 126
    %v516 = vpop.permute.xlu0 %515
    %517 = vrot.lane.b32.xlu0 %v513, 126
    %v518 = vpop.permute.xlu0 %517
    %v521 = vadd.f32 %v508, %v516
    %v522 = vadd.f32 %v509, %v518
    %s523 = scalar_lea.vmem %s3, 16
    %524 = vst.msk [vmem:[%s523] sm:$0xff] %vm310, %v521
    %525 = vst.msk [vmem:[%s523 + $0x8] sm:$0x3f] %vm312, %v522
    // Predicated region
    $region22: #{conv2d_pallas.1} parent=1 // pred_check
      _
    $region23: #{conv2d_pallas.1} parent=1 // pred_check_branch
      %527 = sbr.rel (0) target = $region25
    $region24: #{conv2d_pallas.1} parent=1 // pred_region
      _
    $region25: #{conv2d_pallas.1} parent=1 // pred_fallthru
      _
    // Predicated region
    $region26: #{conv2d_pallas.1} parent=1 // pred_check
      _
    $region27: #{conv2d_pallas.1} parent=1 // pred_check_branch
      %529 = sbr.rel (0) target = $region29
    $region28: #{conv2d_pallas.1} parent=1 // pred_region
      _
    $region29: #{conv2d_pallas.1} parent=1 // pred_fallthru
      _
    %530 = vsyncpa [#allocation4], 1
    %531 = vsyncpa [#allocation5], 1

</llo_original>
